<compile_context>
chip_gen: v7x
topology: tpu7x:2x2x1
jax: 0.10.0
libtpu: 0.0.40
codegen_flags: <defaults>
</compile_context>

<pallas_src>
import numpy as np
import jax
import jax.numpy as jnp
from jax.experimental import pallas as pl
from jax.experimental.pallas import tpu as pltpu


def _vmem_budget():
    """Generation-aware (tiling budget, vmem_limit_bytes)."""
    try:
        cap = int(pltpu.get_tpu_info().vmem_capacity_bytes)
    except Exception:
        cap = 64 * 1024 * 1024          # conservative (v7x per-TC) fallback
    budget = int(cap * 0.40)            # target for the pipelined working set
    limit = int(cap * 0.85)             # scoped-VMEM ceiling handed to Mosaic
    return budget, limit


def _pick_tile_b(B, D, itemsize, ncrops, budget):
    """Largest sublane-aligned divisor of B whose pipelined VMEM footprint fits
    `budget`; prefers >= 2 B-tiles so the 'parallel' grid axis can shard across
    both TensorCores on v7x."""
    if ncrops > 2:
        # teacher (2,tB,D) + student (tB,D), both double-buffered, + f32 exp cache
        per_row = D * (6 * itemsize + 8) + 32
    else:
        # teacher (tB,D) + student (tB,D), double-buffered, no cache
        per_row = D * (4 * itemsize) + 32
    sub = 8 * max(1, 4 // max(1, itemsize))       # 8 f32 / 16 bf16 / 32 int8
    cands = [tb for tb in range(sub, B + 1, sub) if B % tb == 0]
    if not cands:
        return B                                  # tiny/odd B: full-extent block is legal
    fits = [tb for tb in cands if tb * per_row <= budget]
    pool = fits if fits else [min(cands)]
    multi = [tb for tb in pool if B // tb >= 2]
    return max(multi) if multi else max(pool)


def _make_kernel(ncrops, inv_student_temp):
    last_v = ncrops - 1

    def _student_stats(s_ref):
        ss = s_ref[...].astype(jnp.float32) * inv_student_temp
        s_shift = ss - jnp.max(ss, axis=-1, keepdims=True)
        lse = jnp.log(jnp.sum(jnp.exp(s_shift), axis=-1, keepdims=True))
        return s_shift, lse

    def _finalize(v, acc_ref, out_ref):
        @pl.when(v == last_v)
        def _():
            out_ref[...] = jnp.full(out_ref.shape, jnp.sum(acc_ref[...]),
                                    dtype=out_ref.dtype)

    if ncrops == 2:
        # Teacher ref already holds the single valid chunk (1 - v): no cache.
        def kernel(inv_tau_ref, t_ref, s_ref, out_ref, acc_ref):
            v = pl.program_id(1)

            @pl.when(v == 0)
            def _init():
                acc_ref[...] = jnp.zeros_like(acc_ref)

            tt = t_ref[...].astype(jnp.float32) * inv_tau_ref[0]
            t_exp = jnp.exp(tt - jnp.max(tt, axis=-1, keepdims=True))
            inv_sum = 1.0 / jnp.sum(t_exp, axis=-1, keepdims=True)

            s_shift, lse = _student_stats(s_ref)
            cross = inv_sum * jnp.sum(t_exp * s_shift, axis=-1, keepdims=True)
            acc_ref[...] += lse - cross

            _finalize(v, acc_ref, out_ref)

        return kernel

    # ncrops > 2: full (2, tB, D) teacher block is resident per B-tile; cache
    # its unnormalized exp + per-row inverse-sum and reuse for every crop.
    def kernel(inv_tau_ref, t_ref, s_ref, out_ref, texp_ref, tinv_ref, acc_ref):
        v = pl.program_id(1)

        def compute_teacher(iq):
            tt = t_ref[iq].astype(jnp.float32) * inv_tau_ref[0]
            t_exp = jnp.exp(tt - jnp.max(tt, axis=-1, keepdims=True))
            texp_ref[iq] = t_exp
            tinv_ref[iq] = 1.0 / jnp.sum(t_exp, axis=-1, keepdims=True)

        @pl.when(v == 0)
        def _init():
            acc_ref[...] = jnp.zeros_like(acc_ref)
            compute_teacher(1)          # chunk 1 first needed at v == 0

        @pl.when(v == 1)
        def _t0():
            compute_teacher(0)          # chunk 0 first needed at v == 1

        s_shift, lse = _student_stats(s_ref)

        @pl.when(v != 0)
        def _c0():
            cross = tinv_ref[0] * jnp.sum(texp_ref[0] * s_shift,
                                          axis=-1, keepdims=True)
            acc_ref[...] += lse - cross

        @pl.when(v != 1)
        def _c1():
            cross = tinv_ref[1] * jnp.sum(texp_ref[1] * s_shift,
                                          axis=-1, keepdims=True)
            acc_ref[...] += lse - cross

        _finalize(v, acc_ref, out_ref)

    return kernel


class DistillLossPallas:
    def __init__(self, warmup_teacher_temp_epochs, nepochs, ncrops=2,
                 warmup_teacher_temp=0.07, teacher_temp=0.04, student_temp=0.1):
        self.student_temp = float(student_temp)
        self.ncrops = int(ncrops)
        self.teacher_temp_schedule = np.concatenate((
            np.linspace(warmup_teacher_temp, teacher_temp, warmup_teacher_temp_epochs),
            np.ones(nepochs - warmup_teacher_temp_epochs) * teacher_temp))

    def __call__(self, student_output, teacher_output, epoch):
        ncrops = self.ncrops
        inv_student_temp = 1.0 / self.student_temp
        B = student_output.shape[0] // ncrops
        D = student_output.shape[1]
        n_terms = 2 * (ncrops - 1)

        # .chunk(dim=0) equivalents: free reshapes, native dtype kept in HBM.
        s = student_output.reshape(ncrops, B, D)
        t = teacher_output.reshape(2, B, D)

        tau = float(self.teacher_temp_schedule[epoch])
        inv_tau = jnp.asarray([1.0 / tau], dtype=jnp.float32)

        itemsize = max(jnp.dtype(s.dtype).itemsize, jnp.dtype(t.dtype).itemsize)
        budget, vmem_limit = _vmem_budget()
        tB = _pick_tile_b(B, D, itemsize, ncrops, budget)
        n_bt = B // tB

        kernel = _make_kernel(ncrops, inv_student_temp)

        if ncrops == 2:
            # Deliver only the one valid teacher chunk (1 - v) at each step.
            teacher_spec = pl.BlockSpec((pl.Squeezed(), tB, D),
                                        lambda bt, v: (1 - v, bt, 0))
            scratch = [pltpu.VMEM((tB, 1), jnp.float32)]            # accumulator
        else:
            # Whole teacher block; index constant across v => fetched once per bt.
            teacher_spec = pl.BlockSpec((2, tB, D),
                                        lambda bt, v: (0, bt, 0))
            scratch = [pltpu.VMEM((2, tB, D), jnp.float32),         # exp cache
                       pltpu.VMEM((2, tB, 1), jnp.float32),         # 1/sum cache
                       pltpu.VMEM((tB, 1), jnp.float32)]            # accumulator

        grid_spec = pltpu.PrefetchScalarGridSpec(
            num_scalar_prefetch=0,
            grid=(n_bt, ncrops),
            in_specs=[
                pl.BlockSpec(memory_space=pltpu.SMEM),               # 1/teacher_temp
                teacher_spec,
                pl.BlockSpec((pl.Squeezed(), tB, D),
                             lambda bt, v: (v, bt, 0)),              # student crop v
            ],
            # Fully (8,128)-aligned per-B-tile output slab (scalar broadcast).
            out_specs=pl.BlockSpec((1, 8, 128), lambda bt, v: (bt, 0, 0)),
            scratch_shapes=scratch,
        )

        partials = pl.pallas_call(
            kernel,
            out_shape=jax.ShapeDtypeStruct((n_bt, 8, 128), jnp.float32),
            grid_spec=grid_spec,
            compiler_params=pltpu.CompilerParams(
                dimension_semantics=("parallel", "arbitrary"),
                vmem_limit_bytes=vmem_limit),
        )(inv_tau, t, s)

        # Tiny final reduce + normalization in the wrapper.
        return jnp.sum(partials[:, 0, 0]) * (1.0 / (B * n_terms))


def ref_loss(module, student_output, teacher_output, epoch):
    """Pure-JAX reference mirroring the PyTorch forward."""
    student_out = student_output / module.student_temp
    student_chunks = jnp.split(student_out, module.ncrops, axis=0)
    temp = module.teacher_temp_schedule[epoch]
    teacher_sm = jax.nn.softmax(teacher_output / temp, axis=-1)
    teacher_chunks = jnp.split(teacher_sm, 2, axis=0)
    total_loss = 0.0
    n = 0
    for iq, q in enumerate(teacher_chunks):
        for v in range(len(student_chunks)):
            if v == iq:
                continue
            loss = jnp.sum(-q * jax.nn.log_softmax(student_chunks[v], axis=-1),
                           axis=-1)
            total_loss += loss.mean()
            n += 1
    return total_loss / n


if __name__ == "__main__":
    key = jax.random.PRNGKey(0)
    epoch = 5

    # (ncrops, B, D, dtype, tol): exercises the inline-teacher path (ncrops=2),
    # the cached path with n_bt > 1 (ncrops=4, B=32 -> tB=16), and bf16 tiling.
    cases = [
        (2, 8, 32, jnp.float32, 1e-5),
        (4, 32, 128, jnp.float32, 1e-4),
        (4, 32, 128, jnp.bfloat16, 1e-4),
    ]

    for ncrops, B, D, dtype, tol in cases:
        k1, k2, key = jax.random.split(key, 3)
        student = jax.random.normal(k1, (ncrops * B, D),
                                    dtype=jnp.float32).astype(dtype)
        teacher = jax.random.normal(k2, (2 * B, D),
                                    dtype=jnp.float32).astype(dtype)

        mod = DistillLossPallas(warmup_teacher_temp_epochs=10, nepochs=20,
                                ncrops=ncrops)
        out = jax.block_until_ready(mod(student, teacher, epoch))

        expected = ref_loss(mod, student.astype(jnp.float32),
                            teacher.astype(jnp.float32), epoch)
        assert np.allclose(np.asarray(out), np.asarray(expected),
                           rtol=tol, atol=tol), (ncrops, str(dtype), out, expected)

    print("KERNEL_OK")
</pallas_src>

<mosaic_0001>
module attributes {stable_mosaic.version = 11 : i64} {
  func.func @kernel(%arg0: i32, %arg1: i32, %arg2: memref<1xf32, #tpu.memory_space<smem>>, %arg3: memref<1x8x32xf32, #tpu.memory_space<vmem>>, %arg4: memref<1x8x32xf32, #tpu.memory_space<vmem>>, %arg5: memref<1x8x128xf32, #tpu.memory_space<vmem>>, %arg6: memref<8x1xf32, #tpu.memory_space<vmem>>) attributes {dimension_semantics = [#tpu.dimension_semantics<parallel>, #tpu.dimension_semantics<arbitrary>], iteration_bounds = array<i64: 1, 2>, scalar_prefetch = 0 : i64, scratch_operands = 1 : i64, tpu.core_type = #tpu.core_type<tc>, window_params = [{transform_indices = @transform_0, window_bounds = array<i64: 1>}, {transform_indices = @transform_1, window_bounds = array<i64: 1, 8, 32>}, {transform_indices = @transform_2, window_bounds = array<i64: 1, 8, 32>}, {transform_indices = @transform_3, window_bounds = array<i64: 1, 8, 128>}]} {
    %c0_i32 = arith.constant 0 : i32
    %0 = arith.cmpi eq, %arg1, %c0_i32 : i32
    %1 = arith.extui %0 : i1 to i32
    %c0_i32_0 = arith.constant 0 : i32
    %2 = arith.cmpi ne, %1, %c0_i32_0 : i32
    scf.if %2 {
      %cst_18 = arith.constant 0.000000e+00 : f32
      %40 = vector.broadcast %cst_18 : f32 to vector<8x1xf32>
      %c0_19 = arith.constant 0 : index
      %c0_20 = arith.constant 0 : index
      %41 = vector.load %arg6[%c0_19, %c0_20] : memref<8x1xf32, #tpu.memory_space<vmem>>, vector<8x1xf32>
      tpu.vector_store %arg6[%c0_19, %c0_20], %40 {strides = array<i32>} : memref<8x1xf32, #tpu.memory_space<vmem>>, vector<8x1xf32>,
    } else {
    }
    %c0 = arith.constant 0 : index
    %c0_1 = arith.constant 0 : index
    %c0_2 = arith.constant 0 : index
    %3 = vector.load %arg3[%c0, %c0_1, %c0_2] : memref<1x8x32xf32, #tpu.memory_space<vmem>>, vector<1x8x32xf32>
    %4 = vector.shape_cast %3 : vector<1x8x32xf32> to vector<8x32xf32>
    %c0_3 = arith.constant 0 : index
    %5 = memref.load %arg2[%c0_3] : memref<1xf32, #tpu.memory_space<smem>>
    %6 = vector.broadcast %5 : f32 to vector<8x32xf32>
    %7 = arith.mulf %4, %6 : vector<8x32xf32>
    %cst = arith.constant dense<0xFF800000> : vector<8xf32>
    %8 = vector.multi_reduction <maximumf>, %7, %cst [1] : vector<8x32xf32> to vector<8xf32>
    %9 = vector.shape_cast %8 : vector<8xf32> to vector<8x1xf32>
    %10 = vector.broadcast %9 : vector<8x1xf32> to vector<8x32xf32>
    %11 = arith.subf %7, %10 : vector<8x32xf32>
    %12 = math.exp %11 : vector<8x32xf32>
    %cst_4 = arith.constant dense<0.000000e+00> : vector<8xf32>
    %13 = vector.multi_reduction <add>, %12, %cst_4 [1] : vector<8x32xf32> to vector<8xf32>
    %14 = vector.shape_cast %13 : vector<8xf32> to vector<8x1xf32>
    %cst_5 = arith.constant 1.000000e+00 : f32
    %15 = vector.broadcast %cst_5 : f32 to vector<8x1xf32>
    %16 = arith.divf %15, %14 : vector<8x1xf32>
    %c0_6 = arith.constant 0 : index
    %c0_7 = arith.constant 0 : index
    %c0_8 = arith.constant 0 : index
    %17 = vector.load %arg4[%c0_6, %c0_7, %c0_8] : memref<1x8x32xf32, #tpu.memory_space<vmem>>, vector<1x8x32xf32>
    %18 = vector.shape_cast %17 : vector<1x8x32xf32> to vector<8x32xf32>
    %cst_9 = arith.constant 1.000000e+01 : f32
    %19 = vector.broadcast %cst_9 : f32 to vector<8x32xf32>
    %20 = arith.mulf %18, %19 : vector<8x32xf32>
    %cst_10 = arith.constant dense<0xFF800000> : vector<8xf32>
    %21 = vector.multi_reduction <maximumf>, %20, %cst_10 [1] : vector<8x32xf32> to vector<8xf32>
    %22 = vector.shape_cast %21 : vector<8xf32> to vector<8x1xf32>
    %23 = vector.broadcast %22 : vector<8x1xf32> to vector<8x32xf32>
    %24 = arith.subf %20, %23 : vector<8x32xf32>
    %25 = math.exp %24 : vector<8x32xf32>
    %cst_11 = arith.constant dense<0.000000e+00> : vector<8xf32>
    %26 = vector.multi_reduction <add>, %25, %cst_11 [1] : vector<8x32xf32> to vector<8xf32>
    %27 = vector.shape_cast %26 : vector<8xf32> to vector<8x1xf32>
    %28 = math.log %27 : vector<8x1xf32>
    %29 = arith.mulf %12, %24 : vector<8x32xf32>
    %cst_12 = arith.constant dense<0.000000e+00> : vector<8xf32>
    %30 = vector.multi_reduction <add>, %29, %cst_12 [1] : vector<8x32xf32> to vector<8xf32>
    %31 = vector.shape_cast %30 : vector<8xf32> to vector<8x1xf32>
    %32 = arith.mulf %16, %31 : vector<8x1xf32>
    %c0_13 = arith.constant 0 : index
    %c0_14 = arith.constant 0 : index
    %33 = vector.load %arg6[%c0_13, %c0_14] : memref<8x1xf32, #tpu.memory_space<vmem>>, vector<8x1xf32>
    %34 = arith.subf %28, %32 : vector<8x1xf32>
    %35 = arith.addf %33, %34 : vector<8x1xf32>
    %c0_15 = arith.constant 0 : index
    %c0_16 = arith.constant 0 : index
    %36 = vector.load %arg6[%c0_15, %c0_16] : memref<8x1xf32, #tpu.memory_space<vmem>>, vector<8x1xf32>
    tpu.vector_store %arg6[%c0_15, %c0_16], %35 {strides = array<i32>} : memref<8x1xf32, #tpu.memory_space<vmem>>, vector<8x1xf32>,
    %c1_i32 = arith.constant 1 : i32
    %37 = arith.cmpi eq, %arg1, %c1_i32 : i32
    %38 = arith.extui %37 : i1 to i32
    %c0_i32_17 = arith.constant 0 : i32
    %39 = arith.cmpi ne, %38, %c0_i32_17 : i32
    scf.if %39 {
      %c0_18 = arith.constant 0 : index
      %c0_19 = arith.constant 0 : index
      %40 = vector.load %arg6[%c0_18, %c0_19] : memref<8x1xf32, #tpu.memory_space<vmem>>, vector<8x1xf32>
      %41 = vector.shape_cast %40 : vector<8x1xf32> to vector<1x8x1xf32>
      %cst_20 = arith.constant dense<0.000000e+00> : vector<1xf32>
      %42 = vector.multi_reduction <add>, %41, %cst_20 [1, 2] : vector<1x8x1xf32> to vector<1xf32>
      %43 = vector.shape_cast %42 : vector<1xf32> to vector<1x1x1xf32>
      %44 = vector.extract %43[0, 0, 0] : f32 from vector<1x1x1xf32>
      %45 = vector.broadcast %44 : f32 to vector<1x8x128xf32>
      %c0_21 = arith.constant 0 : index
      %c0_22 = arith.constant 0 : index
      %c0_23 = arith.constant 0 : index
      %46 = vector.load %arg5[%c0_21, %c0_22, %c0_23] : memref<1x8x128xf32, #tpu.memory_space<vmem>>, vector<1x8x128xf32>
      tpu.vector_store %arg5[%c0_21, %c0_22, %c0_23], %45 {strides = array<i32>} : memref<1x8x128xf32, #tpu.memory_space<vmem>>, vector<1x8x128xf32>,
    } else {
    }
    return
  }
  func.func @transform_0(%arg0: i32, %arg1: i32) -> i32 {
    %c0_i32 = arith.constant 0 : i32
    %c0_i32_0 = arith.constant 0 : i32
    return %c0_i32 : i32
  }
  func.func @transform_1(%arg0: i32, %arg1: i32) -> (i32, i32, i32) {
    %c1_i32 = arith.constant 1 : i32
    %0 = arith.subi %c1_i32, %arg1 : i32
    %c0_i32 = arith.constant 0 : i32
    %c0_i32_0 = arith.constant 0 : i32
    return %0, %arg0, %c0_i32 : i32, i32, i32
  }
  func.func @transform_2(%arg0: i32, %arg1: i32) -> (i32, i32, i32) {
    %c0_i32 = arith.constant 0 : i32
    %c0_i32_0 = arith.constant 0 : i32
    return %arg1, %arg0, %c0_i32 : i32, i32, i32
  }
  func.func @transform_3(%arg0: i32, %arg1: i32) -> (i32, i32, i32) {
    %c0_i32 = arith.constant 0 : i32
    %c0_i32_0 = arith.constant 0 : i32
    %c0_i32_1 = arith.constant 0 : i32
    return %arg0, %c0_i32, %c0_i32_0 : i32, i32, i32
  }
}

</mosaic_0001>

<llo_original>
// kernel: tpu_custom_call.1
$region0: #{tpu_custom_call.1}
  #allocation0 [shape = 'u32[]', space=smem, size = 0x4, offset = 0x4, fixed_abs, tag = 'smem constant byte address 0x4 - core index']
  #allocation1 [shape = 'u32[144,128]{1,0:T(1,128)}', space=vmem, size = 0x12000, scoped, tag = 'internal scratch']
  #allocation2 [shape = 'f32[8,1]{1,0:T(8,128)}', space=vmem, size = 0x1000, scoped, tag = 'scratch operand']
  #allocation3 [shape = 'f32[1]{0:T(128)S(6)}', space=smem, size = 0x200, scoped, tag = 'scoped memory for tpu_custom_call.1']
  %s0 = inlined_call_operand.<no memory space> [shape: f32[1], index: 0, kind: input, shape index: {}]
  %s1 = inlined_call_operand.hbm [shape: f32[2,8,32], index: 1, kind: input, shape index: {}]
  %s2 = inlined_call_operand.hbm [shape: f32[2,8,32], index: 2, kind: input, shape index: {}]
  %s3 = inlined_call_operand.hbm [shape: f32[1,8,128], index: 3, kind: output, shape index: {}]
  %s4 = sld [smem:[#allocation0]]
  $region61: #{tpu_custom_call.1} parent=0
    _
  %s6 = ssub.s32 1, %s4
  %s7 = scalar_select 0, %s6, %s4
  %8 = sst [smem:[#allocation3]] %s0
  $region1: #{tpu_custom_call.1} parent=0
    #allocation4 [shape = 'u8[8192]{0}', space=vmem, size = 0x2000, scoped, tag = 'input window, operand 1']
    #allocation5 [shape = 's32[2]{0}', space=sflag, size = 0x8, scoped, tag = 'scoped memory for tpu_custom_call.1']
    #allocation6 [shape = 's32[2]{0}', space=sflag, size = 0x8, scoped, tag = 'scoped memory for tpu_custom_call.1']
    #allocation7 [shape = 'u8[8192]{0}', space=vmem, size = 0x2000, scoped, tag = 'input window, operand 2']
    #allocation8 [shape = 's32[2]{0}', space=sflag, size = 0x8, scoped, tag = 'scoped memory for tpu_custom_call.1']
    #allocation9 [shape = 'u8[4096]{0}', space=vmem, size = 0x1000, scoped, tag = 'output window, operand 0, single buffered']
    %9 = vsyncpa [#allocation5], 0
    %s10 = scalar_lea.sflag [#allocation5], 1
    %11 = vsyncpa %s10, 0
    %12 = vsyncpa [#allocation8], 0
    %s13 = scalar_lea.sflag [#allocation8], 1
    %14 = vsyncpa %s13, 0
    %15 = vsyncpa [#allocation6], 0
    loop: start=0, step=1, limit=4
    $region2: #{tpu_custom_call.1} parent=1 // loop_pre_header
      _
    $region3: #{tpu_custom_call.1} parent=1 // loop_header
      %s17 = sphi 0, %s21
      %p18 = scmp.ge.s32.totalorder %s17, 4
      %s24 = sphi 0, %s36
      %s25 = sphi 0, %s32
      %s26 = sphi 0, %s24
      %s27 = sphi 0, %s25
      %s28 = sphi 0, %s26
      %s29 = sphi 0, %s27
      %s37 = sphi 0, %s37
      %s39 = sphi 0, %s37
      %s40 = sphi 0, %s39
      %s54 = sphi 0, %s40
      %s64 = sphi 0, %s66
      %s67 = sphi 0, %s64
      %s68 = sphi 0, %s67
      %s84 = sphi 0, %s68
      %s92 = sphi 0, %s94
      %s95 = sphi 0, %s92
      %s96 = sphi 0, %s95
      %s112 = sphi 0, %s96
      %s118 = sphi 0, %s120
      %s121 = sphi 0, %s118
      %s122 = sphi 0, %s121
      %s138 = sphi 0, %s122
    $region4: #{tpu_custom_call.1} parent=1 // loop_header_branch
      %20 = sbr.rel (%p18) target = $region8
    $region5: #{tpu_custom_call.1} parent=1 // loop_body
      %s22 = ssub.s32 %s17, 1
      %s23 = ssub.s32 %s17, 2
      %s30 = sadd.s32 1, %s25
      %p31 = scmp.ge.s32.totalorder %s30, 2
      %s32 = scalar_select %p31, 0, %s30
      %s33 = sadd.s32 1, %s24
      %s34 = scalar_select %p31, %s33, %s24
      %p35 = scmp.ge.s32.totalorder %s34, 1
      %s36 = scalar_select %p35, 0, %s34
      %s38 = sadd.s32 %s37, 1
      %p41 = scmp.eq.s32.totalorder %s17, 1
      %p42 = scmp.ne.s32.totalorder %s37, %s39
      %p43 = scmp.eq.s32.totalorder %s17, 0
      %p44 = por %p42, %p43
      %p45 = scmp.ne.s32.totalorder %s37, %s39
      %p46 = scmp.eq.s32.totalorder %s22, 1
      %p47 = por %p45, %p46
      %p48 = scmp.ne.s32.totalorder %s39, %s40
      %p49 = scmp.eq.s32.totalorder %s22, 0
      %p50 = por %p48, %p49
      %p51 = scmp.ne.s32.totalorder %s39, %s40
      %p52 = scmp.eq.s32.totalorder %s23, 1
      %p53 = por %p51, %p52
      %p55 = scmp.ne.s32.totalorder %s40, %s54
      %p56 = scmp.eq.s32.totalorder %s23, 0
      %p57 = por %p55, %p56
      %s58 = ssub.s32 1, %s25
      %s59 = ssub.s32 1, %s32
      %s60 = ssub.s32 %s58, %s59
      %s61 = ssub.s32 %s24, %s36
      %s62 = sor.u32 %s60, %s61
      %p63 = scmp.eq.s32.totalorder %s62, 0
      %s65 = sadd.s32 %s64, 1
      %s66 = scalar_select %p63, %s64, %s65
      %p69 = pneg %p63
      %p70 = scmp.eq.s32.totalorder %s17, 1
      %p71 = por %p69, %p70
      %p72 = scmp.ne.s32.totalorder %s64, %s67
      %p73 = scmp.eq.s32.totalorder %s17, 0
      %p74 = por %p72, %p73
      %p75 = scmp.ne.s32.totalorder %s64, %s67
      %p76 = scmp.eq.s32.totalorder %s22, 1
      %p77 = por %p75, %p76
      %p78 = scmp.ne.s32.totalorder %s67, %s68
      %p79 = scmp.eq.s32.totalorder %s22, 0
      %p80 = por %p78, %p79
      %p81 = scmp.ne.s32.totalorder %s67, %s68
      %p82 = scmp.eq.s32.totalorder %s23, 1
      %p83 = por %p81, %p82
      %p85 = scmp.ne.s32.totalorder %s68, %s84
      %p86 = scmp.eq.s32.totalorder %s23, 0
      %p87 = por %p85, %p86
      %s88 = ssub.s32 %s25, %s32
      %s89 = ssub.s32 %s24, %s36
      %s90 = sor.u32 %s88, %s89
      %p91 = scmp.eq.s32.totalorder %s90, 0
      %s93 = sadd.s32 %s92, 1
      %s94 = scalar_select %p91, %s92, %s93
      %p97 = pneg %p91
      %p98 = scmp.eq.s32.totalorder %s17, 1
      %p99 = por %p97, %p98
      %p100 = scmp.ne.s32.totalorder %s92, %s95
      %p101 = scmp.eq.s32.totalorder %s17, 0
      %p102 = por %p100, %p101
      %p103 = scmp.ne.s32.totalorder %s92, %s95
      %p104 = scmp.eq.s32.totalorder %s22, 1
      %p105 = por %p103, %p104
      %p106 = scmp.ne.s32.totalorder %s95, %s96
      %p107 = scmp.eq.s32.totalorder %s22, 0
      %p108 = por %p106, %p107
      %p109 = scmp.ne.s32.totalorder %s95, %s96
      %p110 = scmp.eq.s32.totalorder %s23, 1
      %p111 = por %p109, %p110
      %p113 = scmp.ne.s32.totalorder %s96, %s112
      %p114 = scmp.eq.s32.totalorder %s23, 0
      %p115 = por %p113, %p114
      %s116 = ssub.s32 %s24, %s36
      %p117 = scmp.eq.s32.totalorder %s116, 0
      %s119 = sadd.s32 %s118, 1
      %s120 = scalar_select %p117, %s118, %s119
      %p123 = pneg %p117
      %p124 = scmp.eq.s32.totalorder %s17, 1
      %p125 = por %p123, %p124
      %p126 = scmp.ne.s32.totalorder %s118, %s121
      %p127 = scmp.eq.s32.totalorder %s17, 0
      %p128 = por %p126, %p127
      %p129 = scmp.ne.s32.totalorder %s118, %s121
      %p130 = scmp.eq.s32.totalorder %s22, 1
      %p131 = por %p129, %p130
      %p132 = scmp.ne.s32.totalorder %s121, %s122
      %p133 = scmp.eq.s32.totalorder %s22, 0
      %p134 = por %p132, %p133
      %p135 = scmp.ne.s32.totalorder %s121, %s122
      %p136 = scmp.eq.s32.totalorder %s23, 1
      %p137 = por %p135, %p136
      %p139 = scmp.ne.s32.totalorder %s122, %s138
      %p140 = scmp.eq.s32.totalorder %s23, 0
      %p141 = por %p139, %p140
      %p142 = scmp.le.s32.totalorder 1, %s17
      %p143 = scmp.lt.s32.totalorder %s17, 3
      %p144 = pnand %p142, %p143
      %p145 = pneg %p144
      // Predicated region
      $region9: #{tpu_custom_call.1} parent=5 // pred_check
        _
      $region10: #{tpu_custom_call.1} parent=5 // pred_check_branch
        %147 = sbr.rel (%p144) target = $region12
      $region11: #{tpu_custom_call.1} parent=5 // pred_region
        %s148 = ssub.s32 %s17, 1
        // Predicated region
        $region13: #{tpu_custom_call.1} parent=11 // pred_check
          %p149 = pneg %p50
        $region14: #{tpu_custom_call.1} parent=11 // pred_check_branch
          %151 = sbr.rel (%p149) target = $region16
        $region15: #{tpu_custom_call.1} parent=11 // pred_region
          _
        $region16: #{tpu_custom_call.1} parent=11 // pred_fallthru
          _
      $region12: #{tpu_custom_call.1} parent=5 // pred_fallthru
        _
      %p152 = scmp.lt.s32.totalorder %s17, 2
      // Predicated region
      $region17: #{tpu_custom_call.1} parent=5 // pred_check
        %p153 = pneg %p152
      $region18: #{tpu_custom_call.1} parent=5 // pred_check_branch
        %155 = sbr.rel (%p153) target = $region20
      $region19: #{tpu_custom_call.1} parent=5 // pred_region
        // Predicated region
        $region21: #{tpu_custom_call.1} parent=19 // pred_check
          %p156 = pneg %p74
        $region22: #{tpu_custom_call.1} parent=19 // pred_check_branch
          %158 = sbr.rel (%p156) target = $region24
        $region23: #{tpu_custom_call.1} parent=19 // pred_region
          %s159 = sand.u32 %s64, 1
          %s160 = scalar_lea.sflag [#allocation5], %s159
          %s161 = sand.u32 %s64, 1
          %s162 = smul.addr %s161, 8
          %s163 = scalar_lea.vmem [#allocation4], %s162
          %s164 = ssub.s32 1, %s25
          %s166 = ssub.s32 128, 128
          %167 = vsyncadd %s160, %s166
          %s168 = sadd.s32 %s24, %s164
          %s169 = smul.addr %s168, 128
          %s170 = scalar_lea.hbm %s1, %s169
          %s172 = sshll.u32 %s163, 4
          %s173 = int_to_ptr.vmem [resolvable:$true] %s172
          %175 = dma.hbm_to_vmem [thread:$0]  %s170, 128, %s173, %s160
        $region24: #{tpu_custom_call.1} parent=19 // pred_fallthru
          _
        // Predicated region
        $region25: #{tpu_custom_call.1} parent=19 // pred_check
          %p176 = pneg %p102
        $region26: #{tpu_custom_call.1} parent=19 // pred_check_branch
          %178 = sbr.rel (%p176) target = $region28
        $region27: #{tpu_custom_call.1} parent=19 // pred_region
          %s179 = sand.u32 %s92, 1
          %s180 = scalar_lea.sflag [#allocation8], %s179
          %s181 = sand.u32 %s92, 1
          %s182 = smul.addr %s181, 8
          %s183 = scalar_lea.vmem [#allocation7], %s182
          %s185 = ssub.s32 128, 128
          %186 = vsyncadd %s180, %s185
          %s187 = sadd.s32 %s24, %s25
          %s188 = smul.addr %s187, 128
          %s189 = scalar_lea.hbm %s2, %s188
          %s191 = sshll.u32 %s183, 4
          %s192 = int_to_ptr.vmem [resolvable:$true] %s191
          %194 = dma.hbm_to_vmem [thread:$0]  %s189, 128, %s192, %s180
        $region28: #{tpu_custom_call.1} parent=19 // pred_fallthru
          _
      $region20: #{tpu_custom_call.1} parent=5 // pred_fallthru
        _
      %p195 = scmp.le.s32.totalorder 1, %s17
      %p196 = scmp.lt.s32.totalorder %s17, 3
      %p197 = pnand %p195, %p196
      %p198 = pneg %p197
      // Predicated region
      $region29: #{tpu_custom_call.1} parent=5 // pred_check
        _
      $region30: #{tpu_custom_call.1} parent=5 // pred_check_branch
        %200 = sbr.rel (%p197) target = $region32
      $region31: #{tpu_custom_call.1} parent=5 // pred_region
        %s201 = ssub.s32 %s17, 1
        %s202 = sand.u32 %s67, 1
        %s203 = scalar_lea.sflag [#allocation5], %s202
        %s204 = sand.u32 %s67, 1
        %s205 = smul.addr %s204, 8
        %s206 = scalar_lea.vmem [#allocation4], %s205
        // Predicated region
        $region33: #{tpu_custom_call.1} parent=31 // pred_check
          %p207 = pneg %p80
        $region34: #{tpu_custom_call.1} parent=31 // pred_check_branch
          %209 = sbr.rel (%p207) target = $region36
        $region35: #{tpu_custom_call.1} parent=31 // pred_region
          %210 = dma.done %s203, 128
        $region36: #{tpu_custom_call.1} parent=31 // pred_fallthru
          _
        %s211 = sand.u32 %s95, 1
        %s212 = scalar_lea.sflag [#allocation8], %s211
        %s213 = sand.u32 %s95, 1
        %s214 = smul.addr %s213, 8
        %s215 = scalar_lea.vmem [#allocation7], %s214
        // Predicated region
        $region37: #{tpu_custom_call.1} parent=31 // pred_check
          %p216 = pneg %p108
        $region38: #{tpu_custom_call.1} parent=31 // pred_check_branch
          %218 = sbr.rel (%p216) target = $region40
        $region39: #{tpu_custom_call.1} parent=31 // pred_region
          %219 = dma.done %s212, 128
        $region40: #{tpu_custom_call.1} parent=31 // pred_fallthru
          _
        %p220 = pneg %p50
        %p221 = pneg %p47
        %s222 = sand.u32 %s67, 1
        %s223 = scalar_lea.sflag [#allocation5], %s222
        %s224 = sand.u32 %s67, 1
        %s225 = smul.addr %s224, 8
        %s226 = scalar_lea.vmem [#allocation4], %s225
        %p227 = pneg %p80
        %p228 = pneg %p77
        %s229 = sand.u32 %s95, 1
        %s230 = scalar_lea.sflag [#allocation8], %s229
        %s231 = sand.u32 %s95, 1
        %s232 = smul.addr %s231, 8
        %s233 = scalar_lea.vmem [#allocation7], %s232
        %p234 = pneg %p108
        %p235 = pneg %p105
        %p236 = pneg %p134
        %p237 = pneg %p131
        %s238 = ssub.s32 1, %s27
        %p239 = scmp.eq.s32.totalorder %s27, 0
        // Predicated region
        $region41: #{tpu_custom_call.1} parent=31 // pred_check
          %p240 = pneg %p239
        $region42: #{tpu_custom_call.1} parent=31 // pred_check_branch
          %242 = sbr.rel (%p240) target = $region44
        $region43: #{tpu_custom_call.1} parent=31 // pred_region
          %vm243 = vcmask 7168
          %244 = vst.msk [vmem:[#allocation2] sm:$0xff] %vm243, 0.0
        $region44: #{tpu_custom_call.1} parent=31 // pred_fallthru
          _
        %v245 = vld [vmem:[%s206] sm:$0xff]
        %s246 = sld [smem:[#allocation3]]
        %v247 = vstv %s246
        %v248 = vmul.f32 %v245, %v247
        %vm249 = vcmask 261120
        %v250 = vsel %vm249, %v248, -inf
        %251 = vmax.xlane.f32.xlu0 %v250
        %v252 = vpop.xlane.xlu0 %251
        %v253 = vsub.f32 %v248, %v252
        %v254 = vmul.f32 %v253, 1.442695
        %v255 = vpow.pop %v254
        %v256 = vsel %vm249, %v255, 0.0
        %257 = vadd.xlane.f32.xlu0 %v256
        %v258 = vpop.xlane.xlu0 %257
        %v259 = vrcp.pop %v258
        %v260 = vmul.f32 1.0, %v259
        %v261 = vld [vmem:[%s215] sm:$0xff]
        %v262 = vmul.f32 %v261, 10.0
        %v263 = vsel %vm249, %v262, -inf
        %264 = vmax.xlane.f32.xlu0 %v263
        %v265 = vpop.xlane.xlu0 %264
        %v266 = vsub.f32 %v262, %v265
        %v267 = vmul.f32 %v266, 1.442695
        %v268 = vpow.pop %v267
        %v269 = vsel %vm249, %v268, 0.0
        %270 = vadd.xlane.f32.xlu0 %v269
        %v271 = vpop.xlane.xlu0 %270
        %v272 = vlog2.pop %v271
        %v273 = vmul.f32 %v272, 0.6931472
        %v274 = vmul.f32 %v255, %v266
        %v275 = vsel %vm249, %v274, 0.0
        %276 = vadd.xlane.f32.xlu0 %v275
        %v277 = vpop.xlane.xlu0 %276
        %v278 = vmul.f32 %v260, %v277
        %v279 = vld [vmem:[#allocation2] sm:$0xff]
        %v280 = vsub.f32 %v273, %v278
        %v281 = vadd.f32 %v279, %v280
        %vm282 = vcmask 7168
        %283 = vst.msk [vmem:[#allocation2] sm:$0xff] %vm282, %v281
        %p284 = scmp.eq.s32.totalorder %s27, 1
        // Predicated region
        $region45: #{tpu_custom_call.1} parent=31 // pred_check
          %p285 = pneg %p284
        $region46: #{tpu_custom_call.1} parent=31 // pred_check_branch
          %287 = sbr.rel (%p285) target = $region48
        $region47: #{tpu_custom_call.1} parent=31 // pred_region
          %v288 = vld [vmem:[#allocation2] sm:$0xff]
          %v289 = vsel %vm282, %v288, 0.0
          %290 = vadd.xlane.f32.xlu0 %v289
          %v291 = vpop.xlane.xlu0 %290
          %v292 = vrot.slane %v291, 4
          %v293 = vadd.f32 %v291, %v292
          %v294 = vrot.slane %v293, 2
          %v295 = vadd.f32 %v293, %v294
          %v296 = vrot.slane %v295, 1
          %v297 = vadd.f32 %v295, %v296
          %s298 = vtos %v297
          %v299 = vstv %s298
          %300 = vst [vmem:[#allocation9] sm:$0xff] %v299
        $region48: #{tpu_custom_call.1} parent=31 // pred_fallthru
          _
        // Predicated region
        $region49: #{tpu_custom_call.1} parent=31 // pred_check
          %p301 = pneg %p131
        $region50: #{tpu_custom_call.1} parent=31 // pred_check_branch
          %303 = sbr.rel (%p301) target = $region52
        $region51: #{tpu_custom_call.1} parent=31 // pred_region
          %s305 = ssub.s32 128, 128
          %306 = vsyncadd [#allocation6], %s305
          %s307 = smul.addr %s26, 128
          %s308 = scalar_lea.hbm %s3, %s307
          %s310 = sshll.u32 [#allocation9], 4
          %s311 = int_to_ptr.vmem [resolvable:$true] %s310
          %313 = dma.vmem_to_hbm [thread:$0]  %s311, 128, %s308, [#allocation6]
        $region52: #{tpu_custom_call.1} parent=31 // pred_fallthru
          _
        // Predicated region
        $region53: #{tpu_custom_call.1} parent=31 // pred_check
          %p314 = pneg %p131
        $region54: #{tpu_custom_call.1} parent=31 // pred_check_branch
          %316 = sbr.rel (%p314) target = $region56
        $region55: #{tpu_custom_call.1} parent=31 // pred_region
          %317 = dma.done [#allocation6], 128
        $region56: #{tpu_custom_call.1} parent=31 // pred_fallthru
          _
      $region32: #{tpu_custom_call.1} parent=5 // pred_fallthru
        _
      %p318 = scmp.le.s32.totalorder 2, %s17
      // Predicated region
      $region57: #{tpu_custom_call.1} parent=5 // pred_check
        %p319 = pneg %p318
      $region58: #{tpu_custom_call.1} parent=5 // pred_check_branch
        %321 = sbr.rel (%p319) target = $region60
      $region59: #{tpu_custom_call.1} parent=5 // pred_region
        %s322 = ssub.s32 %s17, 2
      $region60: #{tpu_custom_call.1} parent=5 // pred_fallthru
        _
    $region6: #{tpu_custom_call.1} parent=1 // loop_footer
      %s21 = sadd.s32 1, %s17
    $region7: #{tpu_custom_call.1} parent=1 // loop_footer_branch
      %16 = sbr.rel target = $region3
    $region8: #{tpu_custom_call.1} parent=1 // loop_exit
      _
    %323 = vsyncpa [#allocation5], 1
    %s324 = scalar_lea.sflag [#allocation5], 1
    %325 = vsyncpa %s324, 1
    %326 = vsyncpa [#allocation8], 1
    %s327 = scalar_lea.sflag [#allocation8], 1
    %328 = vsyncpa %s327, 1
    %329 = vsyncpa [#allocation6], 1
    %s330 = scalar_lea.sflag [#allocation6], 1
    %331 = vsyncpa %s330, 1

</llo_original>
